<compile_context>
chip_gen: v7x
topology: tpu7x:2x2x1
jax: 0.10.0
libtpu: 0.0.40
codegen_flags: <defaults>
</compile_context>

<pallas_src>
import math

import jax
import jax.numpy as jnp
from jax.experimental import pallas as pl
from jax.experimental.pallas import tpu as pltpu


def _add_kernel(update_ref, verts_ref, out_ref):
    # Full-width VPU add on a lane-dense VMEM tile.
    out_ref[...] = update_ref[...] + verts_ref[...]


def vertex_model_forward(update, verts, *, lane_width=512, max_block_rows=1024):
    """Pallas equivalent of Model.forward(): returns update + verts."""
    assert update.shape == verts.shape
    assert update.dtype == verts.dtype
    orig_shape = verts.shape
    total = math.prod(orig_shape)

    # Flatten and pad to a lane-dense 2D slab: last dim = lane_width (multiple
    # of 128), rows a multiple of 8 (sublane size).
    chunk = 8 * lane_width
    padded = ((total + chunk - 1) // chunk) * chunk
    pad = padded - total

    u = update.reshape(-1)
    v = verts.reshape(-1)
    if pad:
        u = jnp.pad(u, (0, pad))
        v = jnp.pad(v, (0, pad))

    rows = padded // lane_width
    u2 = u.reshape(rows, lane_width)
    v2 = v.reshape(rows, lane_width)

    # Block rows: as large as possible up to ~2 MiB per block; rows is a
    # multiple of 8, so blk_rows is too.
    blk_rows = min(max_block_rows, rows)
    grid = (pl.cdiv(rows, blk_rows),)

    spec = pl.BlockSpec((blk_rows, lane_width), lambda i: (i, 0))

    # TODO(synk): if the caller can donate the `update` buffer, add
    # input_output_aliases={0: 0} to avoid a third HBM allocation at large N.
    out2 = pl.pallas_call(
        _add_kernel,
        out_shape=jax.ShapeDtypeStruct((rows, lane_width), verts.dtype),
        grid=grid,
        in_specs=[spec, spec],
        out_specs=spec,
        compiler_params=pltpu.CompilerParams(
            dimension_semantics=("parallel",),
        ),
    )(u2, v2)

    return out2.reshape(-1)[:total].reshape(orig_shape)


if __name__ == "__main__":
    key = jax.random.PRNGKey(0)
    k_verts, k_update = jax.random.split(key)

    # Small synthetic mesh: 256 vertices, 3 coords each.
    n_verts, dim = 256, 3
    verts = jax.random.normal(k_verts, (n_verts, dim), dtype=jnp.float32)

    # Parameter init mirrors torch.rand(vertices.shape) * 0.001 (uniform [0,1)).
    update = jax.random.uniform(k_update, (n_verts, dim), dtype=jnp.float32) * 0.001

    out = vertex_model_forward(update, verts)
    jax.block_until_ready(out)

    # Correctness check against plain JAX reference (exact in f32).
    ref = update + verts
    assert out.shape == ref.shape and out.dtype == ref.dtype
    assert jnp.allclose(out, ref, atol=1e-6, rtol=1e-6)

    print("KERNEL_OK")
</pallas_src>

<mosaic_0001>
module attributes {stable_mosaic.version = 11 : i64} {
  func.func @_add_kernel(%arg0: i32, %arg1: memref<8x512xf32, #tpu.memory_space<vmem>>, %arg2: memref<8x512xf32, #tpu.memory_space<vmem>>, %arg3: memref<8x512xf32, #tpu.memory_space<vmem>>) attributes {dimension_semantics = [#tpu.dimension_semantics<parallel>], iteration_bounds = array<i64: 1>, scalar_prefetch = 0 : i64, scratch_operands = 0 : i64, tpu.core_type = #tpu.core_type<tc>, window_params = [{transform_indices = @transform_0, window_bounds = array<i64: 8, 512>}, {transform_indices = @transform_1, window_bounds = array<i64: 8, 512>}, {transform_indices = @transform_2, window_bounds = array<i64: 8, 512>}]} {
    %c0 = arith.constant 0 : index
    %c0_0 = arith.constant 0 : index
    %0 = vector.load %arg1[%c0, %c0_0] : memref<8x512xf32, #tpu.memory_space<vmem>>, vector<8x512xf32>
    %c0_1 = arith.constant 0 : index
    %c0_2 = arith.constant 0 : index
    %1 = vector.load %arg2[%c0_1, %c0_2] : memref<8x512xf32, #tpu.memory_space<vmem>>, vector<8x512xf32>
    %2 = arith.addf %0, %1 : vector<8x512xf32>
    %c0_3 = arith.constant 0 : index
    %c0_4 = arith.constant 0 : index
    %3 = vector.load %arg3[%c0_3, %c0_4] : memref<8x512xf32, #tpu.memory_space<vmem>>, vector<8x512xf32>
    tpu.vector_store %arg3[%c0_3, %c0_4], %2 {strides = array<i32>} : memref<8x512xf32, #tpu.memory_space<vmem>>, vector<8x512xf32>,
    return
  }
  func.func @transform_0(%arg0: i32) -> (i32, i32) {
    %c0_i32 = arith.constant 0 : i32
    %c0_i32_0 = arith.constant 0 : i32
    return %arg0, %c0_i32 : i32, i32
  }
  func.func @transform_1(%arg0: i32) -> (i32, i32) {
    %c0_i32 = arith.constant 0 : i32
    %c0_i32_0 = arith.constant 0 : i32
    return %arg0, %c0_i32 : i32, i32
  }
  func.func @transform_2(%arg0: i32) -> (i32, i32) {
    %c0_i32 = arith.constant 0 : i32
    %c0_i32_0 = arith.constant 0 : i32
    return %arg0, %c0_i32 : i32, i32
  }
}

</mosaic_0001>

<llo_original>
// kernel: tpu_custom_call.1
$region0: #{tpu_custom_call.1}
  #allocation0 [shape = 'u32[]', space=smem, size = 0x4, offset = 0x4, fixed_abs, tag = 'smem constant byte address 0x4 - core index']
  #allocation1 [shape = 'u32[144,128]{1,0:T(1,128)}', space=vmem, size = 0x12000, scoped, tag = 'internal scratch']
  %s0 = inlined_call_operand.hbm [shape: f32[8,512], index: 0, kind: input, shape index: {}]
  %s1 = inlined_call_operand.hbm [shape: f32[8,512], index: 1, kind: input, shape index: {}]
  %s2 = inlined_call_operand.hbm [shape: f32[8,512], index: 2, kind: output, shape index: {}]
  %s3 = sld [smem:[#allocation0]]
  $region26: #{tpu_custom_call.1} parent=0
    _
  %s5 = ssub.s32 1, %s3
  %s6 = scalar_select 0, %s5, %s3
  $region1: #{tpu_custom_call.1} parent=0
    #allocation2 [shape = 'u8[16384]{0}', space=vmem, size = 0x4000, scoped, tag = 'input window, operand 0, single buffered']
    #allocation3 [shape = 's32[1]{0}', space=sflag, size = 0x4, scoped, tag = 'scoped memory for tpu_custom_call.1']
    #allocation4 [shape = 's32[1]{0}', space=sflag, size = 0x4, scoped, tag = 'scoped memory for tpu_custom_call.1']
    #allocation5 [shape = 'u8[16384]{0}', space=vmem, size = 0x4000, scoped, tag = 'input window, operand 1, single buffered']
    #allocation6 [shape = 's32[1]{0}', space=sflag, size = 0x4, scoped, tag = 'scoped memory for tpu_custom_call.1']
    #allocation7 [shape = 'u8[16384]{0}', space=vmem, size = 0x4000, scoped, tag = 'output window, operand 0, single buffered']
    %7 = vsyncpa [#allocation3], 0
    %8 = vsyncpa [#allocation6], 0
    %9 = vsyncpa [#allocation4], 0
    // Predicated region
    $region2: #{tpu_custom_call.1} parent=1 // pred_check
      _
    $region3: #{tpu_custom_call.1} parent=1 // pred_check_branch
      %11 = sbr.rel (0) target = $region5
    $region4: #{tpu_custom_call.1} parent=1 // pred_region
      %s13 = ssub.s32 512, 512
      %14 = vsyncadd [#allocation3], %s13
      %s16 = sshll.u32 [#allocation2], 4
      %s17 = int_to_ptr.vmem [resolvable:$true] %s16
      %19 = dma.hbm_to_vmem [thread:$0]  %s0, 512, %s17, [#allocation3]
    $region5: #{tpu_custom_call.1} parent=1 // pred_fallthru
      _
    // Predicated region
    $region6: #{tpu_custom_call.1} parent=1 // pred_check
      _
    $region7: #{tpu_custom_call.1} parent=1 // pred_check_branch
      %21 = sbr.rel (0) target = $region9
    $region8: #{tpu_custom_call.1} parent=1 // pred_region
      %s23 = ssub.s32 512, 512
      %24 = vsyncadd [#allocation6], %s23
      %s26 = sshll.u32 [#allocation5], 4
      %s27 = int_to_ptr.vmem [resolvable:$true] %s26
      %29 = dma.hbm_to_vmem [thread:$0]  %s1, 512, %s27, [#allocation6]
    $region9: #{tpu_custom_call.1} parent=1 // pred_fallthru
      _
    // Predicated region
    $region10: #{tpu_custom_call.1} parent=1 // pred_check
      _
    $region11: #{tpu_custom_call.1} parent=1 // pred_check_branch
      %31 = sbr.rel (0) target = $region13
    $region12: #{tpu_custom_call.1} parent=1 // pred_region
      %32 = dma.done [#allocation3], 512
    $region13: #{tpu_custom_call.1} parent=1 // pred_fallthru
      _
    // Predicated region
    $region14: #{tpu_custom_call.1} parent=1 // pred_check
      _
    $region15: #{tpu_custom_call.1} parent=1 // pred_check_branch
      %34 = sbr.rel (0) target = $region17
    $region16: #{tpu_custom_call.1} parent=1 // pred_region
      %35 = dma.done [#allocation6], 512
    $region17: #{tpu_custom_call.1} parent=1 // pred_fallthru
      _
    %v36 = vld [vmem:[#allocation2] sm:$0xff]
    %v37 = vld [vmem:[#allocation2 + $0x8] sm:$0xff]
    %v38 = vld [vmem:[#allocation2 + $0x10] sm:$0xff]
    %v39 = vld [vmem:[#allocation2 + $0x18] sm:$0xff]
    %v40 = vld [vmem:[#allocation5] sm:$0xff]
    %v41 = vld [vmem:[#allocation5 + $0x8] sm:$0xff]
    %v42 = vld [vmem:[#allocation5 + $0x10] sm:$0xff]
    %v43 = vld [vmem:[#allocation5 + $0x18] sm:$0xff]
    %v44 = vadd.f32 %v36, %v40
    %v45 = vadd.f32 %v37, %v41
    %v46 = vadd.f32 %v38, %v42
    %v47 = vadd.f32 %v39, %v43
    %48 = vst [vmem:[#allocation7] sm:$0xff] %v44
    %49 = vst [vmem:[#allocation7 + $0x8] sm:$0xff] %v45
    %50 = vst [vmem:[#allocation7 + $0x10] sm:$0xff] %v46
    %51 = vst [vmem:[#allocation7 + $0x18] sm:$0xff] %v47
    // Predicated region
    $region18: #{tpu_custom_call.1} parent=1 // pred_check
      _
    $region19: #{tpu_custom_call.1} parent=1 // pred_check_branch
      %53 = sbr.rel (0) target = $region21
    $region20: #{tpu_custom_call.1} parent=1 // pred_region
      %s55 = ssub.s32 512, 512
      %56 = vsyncadd [#allocation4], %s55
      %s58 = sshll.u32 [#allocation7], 4
      %s59 = int_to_ptr.vmem [resolvable:$true] %s58
      %61 = dma.vmem_to_hbm [thread:$0]  %s59, 512, %s2, [#allocation4]
    $region21: #{tpu_custom_call.1} parent=1 // pred_fallthru
      _
    // Predicated region
    $region22: #{tpu_custom_call.1} parent=1 // pred_check
      _
    $region23: #{tpu_custom_call.1} parent=1 // pred_check_branch
      %63 = sbr.rel (0) target = $region25
    $region24: #{tpu_custom_call.1} parent=1 // pred_region
      %64 = dma.done [#allocation4], 512
    $region25: #{tpu_custom_call.1} parent=1 // pred_fallthru
      _
    %65 = vsyncpa [#allocation3], 1
    %66 = vsyncpa [#allocation6], 1
    %67 = vsyncpa [#allocation4], 1

</llo_original>
